<compile_context>
chip_gen: v6e
topology: v6e:2x2x1
jax: 0.10.0
libtpu: 0.0.40
codegen_flags: <defaults>
</compile_context>

<pallas_src>
import functools

import jax
import jax.numpy as jnp
from jax.experimental import pallas as pl
from jax.experimental.pallas import tpu as pltpu


def _mlp_kernel(x_ref,
                w1_ref, b1_ref, g1_ref, be1_ref,
                w2_ref, b2_ref, g2_ref, be2_ref,
                w3_ref, b3_ref,
                o_ref,
                *, use_softmax: bool, eps: float = 1e-5):
    x = x_ref[...]  # bf16 tile [TB, in_dim]

    def layer_norm(h, g, be):
        # Fused one-pass stats: mu = E[h], var = E[h^2] - mu^2 (biased, like torch LN).
        inv_h = 1.0 / h.shape[-1]
        s1 = jnp.sum(h, axis=-1, keepdims=True)
        s2 = jnp.sum(h * h, axis=-1, keepdims=True)
        mu = s1 * inv_h
        var = s2 * inv_h - mu * mu
        return (h - mu) * jax.lax.rsqrt(var + eps) * g + be

    # ---- Linear 1 + LayerNorm + ReLU (bf16 operands, f32 accumulate) ----
    h = jnp.dot(x, w1_ref[...], preferred_element_type=jnp.float32) + b1_ref[...]
    h = jnp.maximum(layer_norm(h, g1_ref[...], be1_ref[...]), 0.0)

    # ---- Linear 2 + LayerNorm + ReLU ----
    h = jnp.dot(h.astype(jnp.bfloat16), w2_ref[...],
                preferred_element_type=jnp.float32) + b2_ref[...]
    h = jnp.maximum(layer_norm(h, g2_ref[...], be2_ref[...]), 0.0)

    # ---- Output linear ----
    out = jnp.dot(h.astype(jnp.bfloat16), w3_ref[...],
                  preferred_element_type=jnp.float32) + b3_ref[...]

    if use_softmax:
        if out.shape[-1] == 1:
            # softmax over a single logit is exactly 1.0 (matches PyTorch module).
            out = jnp.ones_like(out)
        else:
            m = jnp.max(out, axis=-1, keepdims=True)
            e = jnp.exp(out - m)
            out = e * pl.reciprocal(jnp.sum(e, axis=-1, keepdims=True), approx=True)

    o_ref[...] = out.astype(o_ref.dtype)


def _round_up(n, m):
    return (n + m - 1) // m * m


def simple_order_book_model(x, params, *, use_softmax: bool = False,
                            block_b: int = 512):
    """x: [B, T, F] float32.  Returns [B, output_dim] float32."""
    B = x.shape[0]
    x_flat = x.reshape(B, -1)
    in_dim = x_flat.shape[1]

    (w1, b1, g1, be1, w2, b2, g2, be2, w3, b3) = params
    hidden_dim = w1.shape[1]
    out_dim = w3.shape[1]

    # Batch tile: multiple of the 8-row sublane tile, capped at block_b.
    b_pad = _round_up(B, 8)
    tb = min(block_b, b_pad)
    b_pad = _round_up(b_pad, tb)

    # bf16 operands for the MXU; accumulation stays f32 inside the kernel.
    x_flat = x_flat.astype(jnp.bfloat16)
    if b_pad != B:
        x_flat = jnp.pad(x_flat, ((0, b_pad - B), (0, 0)))
    w1b = w1.astype(jnp.bfloat16)
    w2b = w2.astype(jnp.bfloat16)
    w3b = w3.astype(jnp.bfloat16)

    grid = (b_pad // tb,)

    def const_spec(shape):
        # Weights / biases / LN params: same full block every grid step (VMEM-resident).
        return pl.BlockSpec(shape, lambda i: (0, 0))

    in_specs = [
        pl.BlockSpec((tb, in_dim), lambda i: (i, 0)),   # x tile (grid-varying)
        const_spec(w1b.shape), const_spec(b1.shape),
        const_spec(g1.shape), const_spec(be1.shape),
        const_spec(w2b.shape), const_spec(b2.shape),
        const_spec(g2.shape), const_spec(be2.shape),
        const_spec(w3b.shape), const_spec(b3.shape),
    ]
    out_specs = pl.BlockSpec((tb, out_dim), lambda i: (i, 0))

    flops = 2 * b_pad * (in_dim * hidden_dim + hidden_dim * hidden_dim
                         + hidden_dim * out_dim)
    transcendentals = 2 * b_pad + (b_pad if (use_softmax and out_dim > 1) else 0)
    bytes_accessed = (
        x_flat.size * 2
        + (w1b.size + w2b.size + w3b.size) * 2
        + (b1.size + g1.size + be1.size + b2.size + g2.size + be2.size + b3.size) * 4
        + b_pad * out_dim * 4)

    kernel = functools.partial(_mlp_kernel, use_softmax=use_softmax)

    out = pl.pallas_call(
        kernel,
        out_shape=jax.ShapeDtypeStruct((b_pad, out_dim), jnp.float32),
        grid=grid,
        in_specs=in_specs,
        out_specs=out_specs,
        compiler_params=pltpu.CompilerParams(
            dimension_semantics=("parallel",),          # shards batch across TCs
            vmem_limit_bytes=32 * 1024 * 1024),
        cost_estimate=pl.CostEstimate(
            flops=flops,
            transcendentals=transcendentals,
            bytes_accessed=bytes_accessed),
    )(x_flat, w1b, b1, g1, be1, w2b, b2, g2, be2, w3b, b3)

    return out[:B]


def init_params(key, in_dim, hidden_dim, output_dim):
    """Deterministic init mimicking nn.Linear (uniform +-1/sqrt(fan_in)) and
    nn.LayerNorm (gamma=1, beta=0). Weights stored [in, out]."""
    ks = jax.random.split(key, 6)

    def linear(kw, kb, fan_in, fan_out):
        bound = 1.0 / jnp.sqrt(jnp.float32(fan_in))
        w = jax.random.uniform(kw, (fan_in, fan_out), jnp.float32, -bound, bound)
        b = jax.random.uniform(kb, (1, fan_out), jnp.float32, -bound, bound)
        return w, b

    w1, b1 = linear(ks[0], ks[1], in_dim, hidden_dim)
    w2, b2 = linear(ks[2], ks[3], hidden_dim, hidden_dim)
    w3, b3 = linear(ks[4], ks[5], hidden_dim, output_dim)
    g1 = jnp.ones((1, hidden_dim), jnp.float32)
    be1 = jnp.zeros((1, hidden_dim), jnp.float32)
    g2 = jnp.ones((1, hidden_dim), jnp.float32)
    be2 = jnp.zeros((1, hidden_dim), jnp.float32)
    return (w1, b1, g1, be1, w2, b2, g2, be2, w3, b3)


def _reference(x, params, use_softmax=False, eps=1e-5):
    """Pure-JAX reference with the same bf16-operand / f32-accumulate matmuls."""
    (w1, b1, g1, be1, w2, b2, g2, be2, w3, b3) = params
    h = jnp.dot(x.reshape(x.shape[0], -1).astype(jnp.bfloat16),
                w1.astype(jnp.bfloat16), preferred_element_type=jnp.float32) + b1
    mu = h.mean(-1, keepdims=True)
    var = ((h - mu) ** 2).mean(-1, keepdims=True)
    h = jnp.maximum((h - mu) / jnp.sqrt(var + eps) * g1 + be1, 0.0)
    h = jnp.dot(h.astype(jnp.bfloat16), w2.astype(jnp.bfloat16),
                preferred_element_type=jnp.float32) + b2
    mu = h.mean(-1, keepdims=True)
    var = ((h - mu) ** 2).mean(-1, keepdims=True)
    h = jnp.maximum((h - mu) / jnp.sqrt(var + eps) * g2 + be2, 0.0)
    out = jnp.dot(h.astype(jnp.bfloat16), w3.astype(jnp.bfloat16),
                  preferred_element_type=jnp.float32) + b3
    if use_softmax:
        out = jax.nn.softmax(out, axis=1)
    return out


if __name__ == "__main__":
    key = jax.random.PRNGKey(0)
    k_x, k_p = jax.random.split(key)

    # Small shapes consistent with the module's forward:
    #   batch=2, time_steps=8, order_book_features=16  -> flattened in_dim=128
    B, T, F = 2, 8, 16
    hidden_dim, output_dim = 128, 1   # module defaults
    use_softmax = False               # module default

    x = jax.random.normal(k_x, (B, T, F), jnp.float32)
    params = init_params(k_p, T * F, hidden_dim, output_dim)

    out = simple_order_book_model(x, params, use_softmax=use_softmax)
    out = jax.block_until_ready(out)

    ref = _reference(x, params, use_softmax=use_softmax)
    assert out.shape == (B, output_dim)
    assert jnp.allclose(out, ref, atol=5e-3, rtol=5e-3), float(jnp.abs(out - ref).max())

    print("KERNEL_OK")
</pallas_src>

<mosaic_0001>
module attributes {stable_mosaic.version = 11 : i64} {
  func.func @_mlp_kernel(%arg0: i32, %arg1: memref<8x128xbf16, #tpu.memory_space<vmem>>, %arg2: memref<128x128xbf16, #tpu.memory_space<vmem>>, %arg3: memref<1x128xf32, #tpu.memory_space<vmem>>, %arg4: memref<1x128xf32, #tpu.memory_space<vmem>>, %arg5: memref<1x128xf32, #tpu.memory_space<vmem>>, %arg6: memref<128x128xbf16, #tpu.memory_space<vmem>>, %arg7: memref<1x128xf32, #tpu.memory_space<vmem>>, %arg8: memref<1x128xf32, #tpu.memory_space<vmem>>, %arg9: memref<1x128xf32, #tpu.memory_space<vmem>>, %arg10: memref<128x1xbf16, #tpu.memory_space<vmem>>, %arg11: memref<1x1xf32, #tpu.memory_space<vmem>>, %arg12: memref<8x1xf32, #tpu.memory_space<vmem>>) attributes {dimension_semantics = [#tpu.dimension_semantics<parallel>], iteration_bounds = array<i64: 1>, scalar_prefetch = 0 : i64, scratch_operands = 0 : i64, tpu.core_type = #tpu.core_type<tc>, window_params = [{transform_indices = @transform_0, window_bounds = array<i64: 8, 128>}, {pipeline_mode = #tpu.pipeline_mode<synchronous>, transform_indices = @transform_1, window_bounds = array<i64: 128, 128>}, {pipeline_mode = #tpu.pipeline_mode<synchronous>, transform_indices = @transform_2, window_bounds = array<i64: 1, 128>}, {pipeline_mode = #tpu.pipeline_mode<synchronous>, transform_indices = @transform_3, window_bounds = array<i64: 1, 128>}, {pipeline_mode = #tpu.pipeline_mode<synchronous>, transform_indices = @transform_4, window_bounds = array<i64: 1, 128>}, {pipeline_mode = #tpu.pipeline_mode<synchronous>, transform_indices = @transform_5, window_bounds = array<i64: 128, 128>}, {pipeline_mode = #tpu.pipeline_mode<synchronous>, transform_indices = @transform_6, window_bounds = array<i64: 1, 128>}, {pipeline_mode = #tpu.pipeline_mode<synchronous>, transform_indices = @transform_7, window_bounds = array<i64: 1, 128>}, {pipeline_mode = #tpu.pipeline_mode<synchronous>, transform_indices = @transform_8, window_bounds = array<i64: 1, 128>}, {pipeline_mode = #tpu.pipeline_mode<synchronous>, transform_indices = @transform_9, window_bounds = array<i64: 128, 1>}, {pipeline_mode = #tpu.pipeline_mode<synchronous>, transform_indices = @transform_10, window_bounds = array<i64: 1, 1>}, {transform_indices = @transform_11, window_bounds = array<i64: 8, 1>}]} {
    %c0 = arith.constant 0 : index
    %c0_0 = arith.constant 0 : index
    %0 = vector.load %arg1[%c0, %c0_0] : memref<8x128xbf16, #tpu.memory_space<vmem>>, vector<8x128xbf16>
    %c0_1 = arith.constant 0 : index
    %c0_2 = arith.constant 0 : index
    %1 = vector.load %arg2[%c0_1, %c0_2] : memref<128x128xbf16, #tpu.memory_space<vmem>>, vector<128x128xbf16>
    %cst = arith.constant dense<0.000000e+00> : vector<8x128xf32>
    %2 = tpu.matmul %0, %1, %cst {dimension_numbers = #tpu.dot_dimension_numbers<[1], [0], [0], [1], [0, 0, 1, 1], [], []>} : vector<8x128xbf16>, vector<128x128xbf16>, vector<8x128xf32> -> vector<8x128xf32>
    %c0_3 = arith.constant 0 : index
    %c0_4 = arith.constant 0 : index
    %3 = vector.load %arg3[%c0_3, %c0_4] : memref<1x128xf32, #tpu.memory_space<vmem>>, vector<1x128xf32>
    %4 = vector.broadcast %3 : vector<1x128xf32> to vector<8x128xf32>
    %5 = arith.addf %2, %4 : vector<8x128xf32>
    %c0_5 = arith.constant 0 : index
    %c0_6 = arith.constant 0 : index
    %6 = vector.load %arg4[%c0_5, %c0_6] : memref<1x128xf32, #tpu.memory_space<vmem>>, vector<1x128xf32>
    %c0_7 = arith.constant 0 : index
    %c0_8 = arith.constant 0 : index
    %7 = vector.load %arg5[%c0_7, %c0_8] : memref<1x128xf32, #tpu.memory_space<vmem>>, vector<1x128xf32>
    %cst_9 = arith.constant dense<0.000000e+00> : vector<8xf32>
    %8 = vector.multi_reduction <add>, %5, %cst_9 [1] : vector<8x128xf32> to vector<8xf32>
    %9 = vector.shape_cast %8 : vector<8xf32> to vector<8x1xf32>
    %10 = arith.mulf %5, %5 : vector<8x128xf32>
    %cst_10 = arith.constant dense<0.000000e+00> : vector<8xf32>
    %11 = vector.multi_reduction <add>, %10, %cst_10 [1] : vector<8x128xf32> to vector<8xf32>
    %12 = vector.shape_cast %11 : vector<8xf32> to vector<8x1xf32>
    %cst_11 = arith.constant 7.812500e-03 : f32
    %13 = vector.broadcast %cst_11 : f32 to vector<8x1xf32>
    %14 = arith.mulf %9, %13 : vector<8x1xf32>
    %cst_12 = arith.constant 7.812500e-03 : f32
    %15 = vector.broadcast %cst_12 : f32 to vector<8x1xf32>
    %16 = arith.mulf %12, %15 : vector<8x1xf32>
    %17 = arith.mulf %14, %14 : vector<8x1xf32>
    %18 = arith.subf %16, %17 : vector<8x1xf32>
    %19 = vector.broadcast %14 : vector<8x1xf32> to vector<8x128xf32>
    %20 = arith.subf %5, %19 : vector<8x128xf32>
    %cst_13 = arith.constant 9.99999974E-6 : f32
    %21 = vector.broadcast %cst_13 : f32 to vector<8x1xf32>
    %22 = arith.addf %18, %21 : vector<8x1xf32>
    %23 = math.rsqrt %22 : vector<8x1xf32>
    %24 = vector.broadcast %23 : vector<8x1xf32> to vector<8x128xf32>
    %25 = arith.mulf %20, %24 : vector<8x128xf32>
    %26 = vector.broadcast %6 : vector<1x128xf32> to vector<8x128xf32>
    %27 = arith.mulf %25, %26 : vector<8x128xf32>
    %28 = vector.broadcast %7 : vector<1x128xf32> to vector<8x128xf32>
    %29 = arith.addf %27, %28 : vector<8x128xf32>
    %cst_14 = arith.constant 0.000000e+00 : f32
    %30 = vector.broadcast %cst_14 : f32 to vector<8x128xf32>
    %31 = arith.maximumf %29, %30 : vector<8x128xf32>
    %32 = arith.truncf %31 : vector<8x128xf32> to vector<8x128xbf16>
    %c0_15 = arith.constant 0 : index
    %c0_16 = arith.constant 0 : index
    %33 = vector.load %arg6[%c0_15, %c0_16] : memref<128x128xbf16, #tpu.memory_space<vmem>>, vector<128x128xbf16>
    %cst_17 = arith.constant dense<0.000000e+00> : vector<8x128xf32>
    %34 = tpu.matmul %32, %33, %cst_17 {dimension_numbers = #tpu.dot_dimension_numbers<[1], [0], [0], [1], [0, 0, 1, 1], [], []>} : vector<8x128xbf16>, vector<128x128xbf16>, vector<8x128xf32> -> vector<8x128xf32>
    %c0_18 = arith.constant 0 : index
    %c0_19 = arith.constant 0 : index
    %35 = vector.load %arg7[%c0_18, %c0_19] : memref<1x128xf32, #tpu.memory_space<vmem>>, vector<1x128xf32>
    %36 = vector.broadcast %35 : vector<1x128xf32> to vector<8x128xf32>
    %37 = arith.addf %34, %36 : vector<8x128xf32>
    %c0_20 = arith.constant 0 : index
    %c0_21 = arith.constant 0 : index
    %38 = vector.load %arg8[%c0_20, %c0_21] : memref<1x128xf32, #tpu.memory_space<vmem>>, vector<1x128xf32>
    %c0_22 = arith.constant 0 : index
    %c0_23 = arith.constant 0 : index
    %39 = vector.load %arg9[%c0_22, %c0_23] : memref<1x128xf32, #tpu.memory_space<vmem>>, vector<1x128xf32>
    %cst_24 = arith.constant dense<0.000000e+00> : vector<8xf32>
    %40 = vector.multi_reduction <add>, %37, %cst_24 [1] : vector<8x128xf32> to vector<8xf32>
    %41 = vector.shape_cast %40 : vector<8xf32> to vector<8x1xf32>
    %42 = arith.mulf %37, %37 : vector<8x128xf32>
    %cst_25 = arith.constant dense<0.000000e+00> : vector<8xf32>
    %43 = vector.multi_reduction <add>, %42, %cst_25 [1] : vector<8x128xf32> to vector<8xf32>
    %44 = vector.shape_cast %43 : vector<8xf32> to vector<8x1xf32>
    %cst_26 = arith.constant 7.812500e-03 : f32
    %45 = vector.broadcast %cst_26 : f32 to vector<8x1xf32>
    %46 = arith.mulf %41, %45 : vector<8x1xf32>
    %cst_27 = arith.constant 7.812500e-03 : f32
    %47 = vector.broadcast %cst_27 : f32 to vector<8x1xf32>
    %48 = arith.mulf %44, %47 : vector<8x1xf32>
    %49 = arith.mulf %46, %46 : vector<8x1xf32>
    %50 = arith.subf %48, %49 : vector<8x1xf32>
    %51 = vector.broadcast %46 : vector<8x1xf32> to vector<8x128xf32>
    %52 = arith.subf %37, %51 : vector<8x128xf32>
    %cst_28 = arith.constant 9.99999974E-6 : f32
    %53 = vector.broadcast %cst_28 : f32 to vector<8x1xf32>
    %54 = arith.addf %50, %53 : vector<8x1xf32>
    %55 = math.rsqrt %54 : vector<8x1xf32>
    %56 = vector.broadcast %55 : vector<8x1xf32> to vector<8x128xf32>
    %57 = arith.mulf %52, %56 : vector<8x128xf32>
    %58 = vector.broadcast %38 : vector<1x128xf32> to vector<8x128xf32>
    %59 = arith.mulf %57, %58 : vector<8x128xf32>
    %60 = vector.broadcast %39 : vector<1x128xf32> to vector<8x128xf32>
    %61 = arith.addf %59, %60 : vector<8x128xf32>
    %cst_29 = arith.constant 0.000000e+00 : f32
    %62 = vector.broadcast %cst_29 : f32 to vector<8x128xf32>
    %63 = arith.maximumf %61, %62 : vector<8x128xf32>
    %64 = arith.truncf %63 : vector<8x128xf32> to vector<8x128xbf16>
    %c0_30 = arith.constant 0 : index
    %c0_31 = arith.constant 0 : index
    %65 = vector.load %arg10[%c0_30, %c0_31] : memref<128x1xbf16, #tpu.memory_space<vmem>>, vector<128x1xbf16>
    %cst_32 = arith.constant dense<0.000000e+00> : vector<8x1xf32>
    %66 = tpu.matmul %64, %65, %cst_32 {dimension_numbers = #tpu.dot_dimension_numbers<[1], [0], [0], [1], [0, 0, 1, 1], [], []>} : vector<8x128xbf16>, vector<128x1xbf16>, vector<8x1xf32> -> vector<8x1xf32>
    %c0_33 = arith.constant 0 : index
    %c0_34 = arith.constant 0 : index
    %67 = vector.load %arg11[%c0_33, %c0_34] : memref<1x1xf32, #tpu.memory_space<vmem>>, vector<1x1xf32>
    %68 = vector.broadcast %67 : vector<1x1xf32> to vector<8x1xf32>
    %69 = arith.addf %66, %68 : vector<8x1xf32>
    %c0_35 = arith.constant 0 : index
    %c0_36 = arith.constant 0 : index
    %70 = vector.load %arg12[%c0_35, %c0_36] : memref<8x1xf32, #tpu.memory_space<vmem>>, vector<8x1xf32>
    tpu.vector_store %arg12[%c0_35, %c0_36], %69 {strides = array<i32>} : memref<8x1xf32, #tpu.memory_space<vmem>>, vector<8x1xf32>,
    return
  }
  func.func @transform_0(%arg0: i32) -> (i32, i32) {
    %c0_i32 = arith.constant 0 : i32
    %c0_i32_0 = arith.constant 0 : i32
    return %arg0, %c0_i32 : i32, i32
  }
  func.func @transform_1(%arg0: i32) -> (i32, i32) {
    %c0_i32 = arith.constant 0 : i32
    %c0_i32_0 = arith.constant 0 : i32
    %c0_i32_1 = arith.constant 0 : i32
    return %c0_i32, %c0_i32_0 : i32, i32
  }
  func.func @transform_2(%arg0: i32) -> (i32, i32) {
    %c0_i32 = arith.constant 0 : i32
    %c0_i32_0 = arith.constant 0 : i32
    %c0_i32_1 = arith.constant 0 : i32
    return %c0_i32, %c0_i32_0 : i32, i32
  }
  func.func @transform_3(%arg0: i32) -> (i32, i32) {
    %c0_i32 = arith.constant 0 : i32
    %c0_i32_0 = arith.constant 0 : i32
    %c0_i32_1 = arith.constant 0 : i32
    return %c0_i32, %c0_i32_0 : i32, i32
  }
  func.func @transform_4(%arg0: i32) -> (i32, i32) {
    %c0_i32 = arith.constant 0 : i32
    %c0_i32_0 = arith.constant 0 : i32
    %c0_i32_1 = arith.constant 0 : i32
    return %c0_i32, %c0_i32_0 : i32, i32
  }
  func.func @transform_5(%arg0: i32) -> (i32, i32) {
    %c0_i32 = arith.constant 0 : i32
    %c0_i32_0 = arith.constant 0 : i32
    %c0_i32_1 = arith.constant 0 : i32
    return %c0_i32, %c0_i32_0 : i32, i32
  }
  func.func @transform_6(%arg0: i32) -> (i32, i32) {
    %c0_i32 = arith.constant 0 : i32
    %c0_i32_0 = arith.constant 0 : i32
    %c0_i32_1 = arith.constant 0 : i32
    return %c0_i32, %c0_i32_0 : i32, i32
  }
  func.func @transform_7(%arg0: i32) -> (i32, i32) {
    %c0_i32 = arith.constant 0 : i32
    %c0_i32_0 = arith.constant 0 : i32
    %c0_i32_1 = arith.constant 0 : i32
    return %c0_i32, %c0_i32_0 : i32, i32
  }
  func.func @transform_8(%arg0: i32) -> (i32, i32) {
    %c0_i32 = arith.constant 0 : i32
    %c0_i32_0 = arith.constant 0 : i32
    %c0_i32_1 = arith.constant 0 : i32
    return %c0_i32, %c0_i32_0 : i32, i32
  }
  func.func @transform_9(%arg0: i32) -> (i32, i32) {
    %c0_i32 = arith.constant 0 : i32
    %c0_i32_0 = arith.constant 0 : i32
    %c0_i32_1 = arith.constant 0 : i32
    return %c0_i32, %c0_i32_0 : i32, i32
  }
  func.func @transform_10(%arg0: i32) -> (i32, i32) {
    %c0_i32 = arith.constant 0 : i32
    %c0_i32_0 = arith.constant 0 : i32
    %c0_i32_1 = arith.constant 0 : i32
    return %c0_i32, %c0_i32_0 : i32, i32
  }
  func.func @transform_11(%arg0: i32) -> (i32, i32) {
    %c0_i32 = arith.constant 0 : i32
    %c0_i32_0 = arith.constant 0 : i32
    return %arg0, %c0_i32 : i32, i32
  }
}

</mosaic_0001>

<llo_original>
// kernel: tpu_custom_call.1
$region0: #{tpu_custom_call.1}
  #allocation0 [shape = 'u32[]', space=smem, size = 0x4, offset = 0x4, fixed_abs, tag = 'smem constant byte address 0x4 - core index']
  #allocation1 [shape = 'u32[144,128]{1,0:T(1,128)}', space=vmem, size = 0x12000, scoped, tag = 'internal scratch']
  #allocation2 [shape = 'f32[1,1]{1,0:T(1,128)S(1)}', space=vmem, size = 0x200, scoped, tag = 'scoped memory for tpu_custom_call.1']
  %s0 = inlined_call_operand.vmem [shape: bf16[8,128], index: 0, kind: input, shape index: {}]
  %s1 = inlined_call_operand.vmem [shape: bf16[128,128], index: 1, kind: input, shape index: {}]
  %s2 = inlined_call_operand.vmem [shape: f32[1,128], index: 2, kind: input, shape index: {}]
  %s3 = inlined_call_operand.vmem [shape: f32[1,128], index: 3, kind: input, shape index: {}]
  %s4 = inlined_call_operand.vmem [shape: f32[1,128], index: 4, kind: input, shape index: {}]
  %s5 = inlined_call_operand.hbm [shape: bf16[128,128], index: 5, kind: input, shape index: {}]
  %s6 = inlined_call_operand.vmem [shape: f32[1,128], index: 6, kind: input, shape index: {}]
  %s7 = inlined_call_operand.vmem [shape: f32[1,128], index: 7, kind: input, shape index: {}]
  %s8 = inlined_call_operand.vmem [shape: f32[1,128], index: 8, kind: input, shape index: {}]
  %s9 = inlined_call_operand.vmem [shape: bf16[128,1], index: 9, kind: input, shape index: {}]
  %s10 = inlined_call_operand.<no memory space> [shape: f32[1,1], index: 10, kind: input, shape index: {}]
  %s11 = inlined_call_operand.vmem [shape: f32[8,1], index: 11, kind: output, shape index: {}]
  %s12 = sld [smem:[#allocation0]]
  $region58: #{tpu_custom_call.1} parent=0
    _
  %s14 = ssub.s32 1, %s12
  %s15 = scalar_select 0, %s14, %s12
  %v16 = vstv %s10
  %17 = vst [vmem:[#allocation2] sm:$0x1] %v16
  $region1: #{tpu_custom_call.1} parent=0
    #allocation3 [shape = 'u8[32768]{0}', space=vmem, size = 0x8000, scoped, tag = 'input window, operand 5, single buffered']
    #allocation4 [shape = 's32[1]{0}', space=sflag, size = 0x4, scoped, tag = 'scoped memory for tpu_custom_call.1']
    %18 = vsyncpa [#allocation4], 0
    // Predicated region
    $region2: #{tpu_custom_call.1} parent=1 // pred_check
      _
    $region3: #{tpu_custom_call.1} parent=1 // pred_check_branch
      %20 = sbr.rel (0) target = $region5
    $region4: #{tpu_custom_call.1} parent=1 // pred_region
      _
    $region5: #{tpu_custom_call.1} parent=1 // pred_fallthru
      _
    // Predicated region
    $region6: #{tpu_custom_call.1} parent=1 // pred_check
      _
    $region7: #{tpu_custom_call.1} parent=1 // pred_check_branch
      %22 = sbr.rel (0) target = $region9
    $region8: #{tpu_custom_call.1} parent=1 // pred_region
      _
    $region9: #{tpu_custom_call.1} parent=1 // pred_fallthru
      _
    // Predicated region
    $region10: #{tpu_custom_call.1} parent=1 // pred_check
      _
    $region11: #{tpu_custom_call.1} parent=1 // pred_check_branch
      %24 = sbr.rel (0) target = $region13
    $region12: #{tpu_custom_call.1} parent=1 // pred_region
      _
    $region13: #{tpu_custom_call.1} parent=1 // pred_fallthru
      _
    // Predicated region
    $region14: #{tpu_custom_call.1} parent=1 // pred_check
      _
    $region15: #{tpu_custom_call.1} parent=1 // pred_check_branch
      %26 = sbr.rel (0) target = $region17
    $region16: #{tpu_custom_call.1} parent=1 // pred_region
      _
    $region17: #{tpu_custom_call.1} parent=1 // pred_fallthru
      _
    // Predicated region
    $region18: #{tpu_custom_call.1} parent=1 // pred_check
      _
    $region19: #{tpu_custom_call.1} parent=1 // pred_check_branch
      %28 = sbr.rel (0) target = $region21
    $region20: #{tpu_custom_call.1} parent=1 // pred_region
      _
    $region21: #{tpu_custom_call.1} parent=1 // pred_fallthru
      _
    // Predicated region
    $region22: #{tpu_custom_call.1} parent=1 // pred_check
      _
    $region23: #{tpu_custom_call.1} parent=1 // pred_check_branch
      %30 = sbr.rel (0) target = $region25
    $region24: #{tpu_custom_call.1} parent=1 // pred_region
      %s32 = ssub.s32 1024, 1024
      %33 = vsyncadd [#allocation4], %s32
      %s34 = sshll.u32 [#allocation3], 4
      %s35 = int_to_ptr.vmem [resolvable:$true] %s34
      %40 = dma.hbm_to_vmem [thread:$0]  %s5, 1024, %s35, [#allocation4], 64, 64, 4
    $region25: #{tpu_custom_call.1} parent=1 // pred_fallthru
      _
    // Predicated region
    $region26: #{tpu_custom_call.1} parent=1 // pred_check
      _
    $region27: #{tpu_custom_call.1} parent=1 // pred_check_branch
      %42 = sbr.rel (0) target = $region29
    $region28: #{tpu_custom_call.1} parent=1 // pred_region
      _
    $region29: #{tpu_custom_call.1} parent=1 // pred_fallthru
      _
    // Predicated region
    $region30: #{tpu_custom_call.1} parent=1 // pred_check
      _
    $region31: #{tpu_custom_call.1} parent=1 // pred_check_branch
      %44 = sbr.rel (0) target = $region33
    $region32: #{tpu_custom_call.1} parent=1 // pred_region
      _
    $region33: #{tpu_custom_call.1} parent=1 // pred_fallthru
      _
    // Predicated region
    $region34: #{tpu_custom_call.1} parent=1 // pred_check
      _
    $region35: #{tpu_custom_call.1} parent=1 // pred_check_branch
      %46 = sbr.rel (0) target = $region37
    $region36: #{tpu_custom_call.1} parent=1 // pred_region
      _
    $region37: #{tpu_custom_call.1} parent=1 // pred_fallthru
      _
    // Predicated region
    $region38: #{tpu_custom_call.1} parent=1 // pred_check
      _
    $region39: #{tpu_custom_call.1} parent=1 // pred_check_branch
      %48 = sbr.rel (0) target = $region41
    $region40: #{tpu_custom_call.1} parent=1 // pred_region
      _
    $region41: #{tpu_custom_call.1} parent=1 // pred_fallthru
      _
    // Predicated region
    $region42: #{tpu_custom_call.1} parent=1 // pred_check
      _
    $region43: #{tpu_custom_call.1} parent=1 // pred_check_branch
      %50 = sbr.rel (0) target = $region45
    $region44: #{tpu_custom_call.1} parent=1 // pred_region
      _
    $region45: #{tpu_custom_call.1} parent=1 // pred_fallthru
      _
    // Predicated region
    $region46: #{tpu_custom_call.1} parent=1 // pred_check
      _
    $region47: #{tpu_custom_call.1} parent=1 // pred_check_branch
      %52 = sbr.rel (0) target = $region49
    $region48: #{tpu_custom_call.1} parent=1 // pred_region
      %53 = dma.done [#allocation4], 1024
    $region49: #{tpu_custom_call.1} parent=1 // pred_fallthru
      _
    %v55 = vld [vmem:[%s0] sm:$0xf]
    %v56 = vld [vmem:[%s1] sm:$0xf]
    %v57 = vld [vmem:[%s1 + $0x4] sm:$0xf]
    %v58 = vld [vmem:[%s1 + $0x8] sm:$0xf]
    %v59 = vld [vmem:[%s1 + $0xc] sm:$0xf]
    %v60 = vld [vmem:[%s1 + $0x10] sm:$0xf]
    %v61 = vld [vmem:[%s1 + $0x14] sm:$0xf]
    %v62 = vld [vmem:[%s1 + $0x18] sm:$0xf]
    %v63 = vld [vmem:[%s1 + $0x1c] sm:$0xf]
    %v64 = vld [vmem:[%s1 + $0x20] sm:$0xf]
    %v65 = vld [vmem:[%s1 + $0x24] sm:$0xf]
    %v66 = vld [vmem:[%s1 + $0x28] sm:$0xf]
    %v67 = vld [vmem:[%s1 + $0x2c] sm:$0xf]
    %v68 = vld [vmem:[%s1 + $0x30] sm:$0xf]
    %v69 = vld [vmem:[%s1 + $0x34] sm:$0xf]
    %v70 = vld [vmem:[%s1 + $0x38] sm:$0xf]
    %v71 = vld [vmem:[%s1 + $0x3c] sm:$0xf]
    %v72 = vld [vmem:[%s2] sm:$0x1]
    %v74 = vlaneseq
    %v75 = vshrl.u32 %v74, 7
    %v76 = vsub.s32 0, %v75
    %v77 = vrot.slane %v72, %v76
    %v95 = vunpack.c.l.b16 %v56
    %v96 = vunpack.c.l.b16 %v57
    %v97 = vunpack.c.l.b16 %v58
    %v98 = vunpack.c.l.b16 %v59
    %v99 = vunpack.c.l.b16 %v60
    %v100 = vunpack.c.l.b16 %v61
    %v101 = vunpack.c.l.b16 %v62
    %v102 = vunpack.c.l.b16 %v63
    %v103 = vunpack.c.l.b16 %v64
    %v104 = vunpack.c.l.b16 %v65
    %v105 = vunpack.c.l.b16 %v66
    %v106 = vunpack.c.l.b16 %v67
    %v107 = vunpack.c.l.b16 %v68
    %v108 = vunpack.c.l.b16 %v69
    %v109 = vunpack.c.l.b16 %v70
    %v110 = vunpack.c.l.b16 %v71
    %v111 = vpack.c.b16 %v96, %v95
    %v112 = vpack.c.b16 %v98, %v97
    %v113 = vpack.c.b16 %v100, %v99
    %v114 = vpack.c.b16 %v102, %v101
    %v115 = vpack.c.b16 %v104, %v103
    %v116 = vpack.c.b16 %v106, %v105
    %v117 = vpack.c.b16 %v108, %v107
    %v118 = vpack.c.b16 %v110, %v109
    %127 = vmatprep.subr.bf16.mxu0 0
    %128 = vmatpush1.bf16.msra.mxu0 %v118
    %129 = vmatprep.subr.bf16.mxu0 0
    %130 = vmatpush1.bf16.msra.mxu0 %v117
    %131 = vmatprep.subr.bf16.mxu0 0
    %132 = vmatpush1.bf16.msra.mxu0 %v116
    %133 = vmatprep.subr.bf16.mxu0 0
    %134 = vmatpush1.bf16.msra.mxu0 %v115
    %135 = vmatprep.subr.bf16.mxu0 0
    %136 = vmatpush1.bf16.msra.mxu0 %v114
    %137 = vmatprep.subr.bf16.mxu0 0
    %138 = vmatpush1.bf16.msra.mxu0 %v113
    %139 = vmatprep.subr.bf16.mxu0 0
    %140 = vmatpush1.bf16.msra.mxu0 %v112
    %141 = vmatprep.subr.bf16.mxu0 0
    %142 = vmatpush1.bf16.msra.mxu0 %v111
    %143 = vmatprep.subr.bf16.mxu0 0
    %144 = vmatpush2.bf16.msra.mxu0 0
    %145 = vmatprep.subr.bf16.mxu0 0
    %146 = vmatpush2.bf16.msra.mxu0 0
    %147 = vmatprep.subr.bf16.mxu0 0
    %148 = vmatpush2.bf16.msra.mxu0 0
    %149 = vmatprep.subr.bf16.mxu0 0
    %150 = vmatpush2.bf16.msra.mxu0 0
    %151 = vmatprep.subr.bf16.mxu0 0
    %152 = vmatpush2.bf16.msra.mxu0 0
    %153 = vmatprep.subr.bf16.mxu0 0
    %154 = vmatpush2.bf16.msra.mxu0 0
    %155 = vmatprep.subr.bf16.mxu0 0
    %156 = vmatpush2.bf16.msra.mxu0 0
    %157 = vmatprep.subr.bf16.mxu0 0
    %158 = vmatpush2.bf16.msra.mxu0 0
    %159 = vmatprep.mubr.bf16.mxu0 0
    %160 = vmatmul.mubr.bf16.gmra.mxu0 %v55
    %v161 = vpop.f32.mrf.mxu0
    %v162 = vadd.f32 %v77, %v161
    %v163 = vpop.f32.mrf.mxu0
    %v164 = vpop.f32.mrf.mxu0
    %v165 = vpop.f32.mrf.mxu0
    %166 = vdwg.mxu0
    %v167 = vld [vmem:[%s3] sm:$0x1]
    %v168 = vld [vmem:[%s4] sm:$0x1]
    %169 = vadd.xlane.f32.xlu0 %v162
    %v170 = vpop.xlane.xlu0 %169
    %v171 = vmul.f32 %v162, %v162
    %172 = vadd.xlane.f32.xlu0 %v171
    %v173 = vpop.xlane.xlu0 %172
    %v174 = vmul.f32 %v170, 0.0078125
    %v175 = vmul.f32 %v173, 0.0078125
    %v176 = vmul.f32 %v174, %v174
    %v177 = vsub.f32 %v175, %v176
    %v178 = vsub.f32 %v162, %v174
    %v179 = vadd.f32 %v177, 1e-05
    %v180 = vrsqrt.pop %v179
    %v181 = vmul.f32 %v178, %v180
    %v183 = vlaneseq
    %v184 = vshrl.u32 %v183, 7
    %v185 = vsub.s32 0, %v184
    %v186 = vrot.slane %v167, %v185
    %v188 = vmul.f32 %v181, %v186
    %v190 = vlaneseq
    %v191 = vshrl.u32 %v190, 7
    %v192 = vsub.s32 0, %v191
    %v193 = vrot.slane %v168, %v192
    %v195 = vadd.f32 %v188, %v193
    %v196 = vmax.f32 %v195, 0.0
    %v197 = vpack.c.bf16 %v196, %v196
    %v198 = vld [vmem:[#allocation3] sm:$0xf]
    %v199 = vld [vmem:[#allocation3 + $0x4] sm:$0xf]
    %v200 = vld [vmem:[#allocation3 + $0x8] sm:$0xf]
    %v201 = vld [vmem:[#allocation3 + $0xc] sm:$0xf]
    %v202 = vld [vmem:[#allocation3 + $0x10] sm:$0xf]
    %v203 = vld [vmem:[#allocation3 + $0x14] sm:$0xf]
    %v204 = vld [vmem:[#allocation3 + $0x18] sm:$0xf]
    %v205 = vld [vmem:[#allocation3 + $0x1c] sm:$0xf]
    %v206 = vld [vmem:[#allocation3 + $0x20] sm:$0xf]
    %v207 = vld [vmem:[#allocation3 + $0x24] sm:$0xf]
    %v208 = vld [vmem:[#allocation3 + $0x28] sm:$0xf]
    %v209 = vld [vmem:[#allocation3 + $0x2c] sm:$0xf]
    %v210 = vld [vmem:[#allocation3 + $0x30] sm:$0xf]
    %v211 = vld [vmem:[#allocation3 + $0x34] sm:$0xf]
    %v212 = vld [vmem:[#allocation3 + $0x38] sm:$0xf]
    %v213 = vld [vmem:[#allocation3 + $0x3c] sm:$0xf]
    %v214 = vld [vmem:[%s6] sm:$0x1]
    %v216 = vlaneseq
    %v217 = vshrl.u32 %v216, 7
    %v218 = vsub.s32 0, %v217
    %v219 = vrot.slane %v214, %v218
    %v237 = vunpack.c.l.b16 %v198
    %v238 = vunpack.c.l.b16 %v199
    %v239 = vunpack.c.l.b16 %v200
    %v240 = vunpack.c.l.b16 %v201
    %v241 = vunpack.c.l.b16 %v202
    %v242 = vunpack.c.l.b16 %v203
    %v243 = vunpack.c.l.b16 %v204
    %v244 = vunpack.c.l.b16 %v205
    %v245 = vunpack.c.l.b16 %v206
    %v246 = vunpack.c.l.b16 %v207
    %v247 = vunpack.c.l.b16 %v208
    %v248 = vunpack.c.l.b16 %v209
    %v249 = vunpack.c.l.b16 %v210
    %v250 = vunpack.c.l.b16 %v211
    %v251 = vunpack.c.l.b16 %v212
    %v252 = vunpack.c.l.b16 %v213
    %v253 = vpack.c.b16 %v238, %v237
    %v254 = vpack.c.b16 %v240, %v239
    %v255 = vpack.c.b16 %v242, %v241
    %v256 = vpack.c.b16 %v244, %v243
    %v257 = vpack.c.b16 %v246, %v245
    %v258 = vpack.c.b16 %v248, %v247
    %v259 = vpack.c.b16 %v250, %v249
    %v260 = vpack.c.b16 %v252, %v251
    %269 = vmatprep.subr.bf16.mxu0 0
    %270 = vmatpush1.bf16.msra.mxu0 %v260
    %271 = vmatprep.subr.bf16.mxu0 0
    %272 = vmatpush1.bf16.msra.mxu0 %v259
    %273 = vmatprep.subr.bf16.mxu0 0
    %274 = vmatpush1.bf16.msra.mxu0 %v258
    %275 = vmatprep.subr.bf16.mxu0 0
    %276 = vmatpush1.bf16.msra.mxu0 %v257
    %277 = vmatprep.subr.bf16.mxu0 0
    %278 = vmatpush1.bf16.msra.mxu0 %v256
    %279 = vmatprep.subr.bf16.mxu0 0
    %280 = vmatpush1.bf16.msra.mxu0 %v255
    %281 = vmatprep.subr.bf16.mxu0 0
    %282 = vmatpush1.bf16.msra.mxu0 %v254
    %283 = vmatprep.subr.bf16.mxu0 0
    %284 = vmatpush1.bf16.msra.mxu0 %v253
    %285 = vmatprep.subr.bf16.mxu0 0
    %286 = vmatpush2.bf16.msra.mxu0 0
    %287 = vmatprep.subr.bf16.mxu0 0
    %288 = vmatpush2.bf16.msra.mxu0 0
    %289 = vmatprep.subr.bf16.mxu0 0
    %290 = vmatpush2.bf16.msra.mxu0 0
    %291 = vmatprep.subr.bf16.mxu0 0
    %292 = vmatpush2.bf16.msra.mxu0 0
    %293 = vmatprep.subr.bf16.mxu0 0
    %294 = vmatpush2.bf16.msra.mxu0 0
    %295 = vmatprep.subr.bf16.mxu0 0
    %296 = vmatpush2.bf16.msra.mxu0 0
    %297 = vmatprep.subr.bf16.mxu0 0
    %298 = vmatpush2.bf16.msra.mxu0 0
    %299 = vmatprep.subr.bf16.mxu0 0
    %300 = vmatpush2.bf16.msra.mxu0 0
    %301 = vmatprep.mubr.bf16.mxu0 0
    %302 = vmatmul.mubr.bf16.gmra.mxu0 %v197
    %v303 = vpop.f32.mrf.mxu0
    %v304 = vadd.f32 %v219, %v303
    %v305 = vpop.f32.mrf.mxu0
    %v306 = vpop.f32.mrf.mxu0
    %v307 = vpop.f32.mrf.mxu0
    %308 = vdwg.mxu0
    %v309 = vld [vmem:[%s7] sm:$0x1]
    %v310 = vld [vmem:[%s8] sm:$0x1]
    %311 = vadd.xlane.f32.xlu0 %v304
    %v312 = vpop.xlane.xlu0 %311
    %v313 = vmul.f32 %v304, %v304
    %314 = vadd.xlane.f32.xlu0 %v313
    %v315 = vpop.xlane.xlu0 %314
    %v316 = vmul.f32 %v312, 0.0078125
    %v317 = vmul.f32 %v315, 0.0078125
    %v318 = vmul.f32 %v316, %v316
    %v319 = vsub.f32 %v317, %v318
    %v320 = vsub.f32 %v304, %v316
    %v321 = vadd.f32 %v319, 1e-05
    %v322 = vrsqrt.pop %v321
    %v323 = vmul.f32 %v320, %v322
    %v325 = vlaneseq
    %v326 = vshrl.u32 %v325, 7
    %v327 = vsub.s32 0, %v326
    %v328 = vrot.slane %v309, %v327
    %v330 = vmul.f32 %v323, %v328
    %v332 = vlaneseq
    %v333 = vshrl.u32 %v332, 7
    %v334 = vsub.s32 0, %v333
    %v335 = vrot.slane %v310, %v334
    %v337 = vadd.f32 %v330, %v335
    %v338 = vmax.f32 %v337, 0.0
    %v339 = vpack.c.bf16 %v338, %v338
    %v340 = vld [vmem:[%s9] sm:$0xf]
    %v341 = vld [vmem:[%s9 + $0x4] sm:$0xf]
    %v342 = vld [vmem:[%s9 + $0x8] sm:$0xf]
    %v343 = vld [vmem:[%s9 + $0xc] sm:$0xf]
    %v344 = vld [vmem:[%s9 + $0x10] sm:$0xf]
    %v345 = vld [vmem:[%s9 + $0x14] sm:$0xf]
    %v346 = vld [vmem:[%s9 + $0x18] sm:$0xf]
    %v347 = vld [vmem:[%s9 + $0x1c] sm:$0xf]
    %v348 = vld [vmem:[%s9 + $0x20] sm:$0xf]
    %v349 = vld [vmem:[%s9 + $0x24] sm:$0xf]
    %v350 = vld [vmem:[%s9 + $0x28] sm:$0xf]
    %v351 = vld [vmem:[%s9 + $0x2c] sm:$0xf]
    %v352 = vld [vmem:[%s9 + $0x30] sm:$0xf]
    %v353 = vld [vmem:[%s9 + $0x34] sm:$0xf]
    %v354 = vld [vmem:[%s9 + $0x38] sm:$0xf]
    %v355 = vld [vmem:[%s9 + $0x3c] sm:$0xf]
    %v356 = vld [vmem:[#allocation2] sm:$0x1]
    %v358 = vlaneseq
    %v359 = vshrl.u32 %v358, 7
    %v360 = vsub.s32 0, %v359
    %v361 = vrot.slane %v356, %v360
    %v379 = vunpack.c.l.b16 %v340
    %v380 = vunpack.c.l.b16 %v341
    %v381 = vunpack.c.l.b16 %v342
    %v382 = vunpack.c.l.b16 %v343
    %v383 = vunpack.c.l.b16 %v344
    %v384 = vunpack.c.l.b16 %v345
    %v385 = vunpack.c.l.b16 %v346
    %v386 = vunpack.c.l.b16 %v347
    %v387 = vunpack.c.l.b16 %v348
    %v388 = vunpack.c.l.b16 %v349
    %v389 = vunpack.c.l.b16 %v350
    %v390 = vunpack.c.l.b16 %v351
    %v391 = vunpack.c.l.b16 %v352
    %v392 = vunpack.c.l.b16 %v353
    %v393 = vunpack.c.l.b16 %v354
    %v394 = vunpack.c.l.b16 %v355
    %v395 = vpack.c.b16 %v380, %v379
    %v396 = vpack.c.b16 %v382, %v381
    %v397 = vpack.c.b16 %v384, %v383
    %v398 = vpack.c.b16 %v386, %v385
    %v399 = vpack.c.b16 %v388, %v387
    %v400 = vpack.c.b16 %v390, %v389
    %v401 = vpack.c.b16 %v392, %v391
    %v402 = vpack.c.b16 %v394, %v393
    %411 = vmatprep.subr.bf16.mxu0 0
    %412 = vmatpush1.bf16.msra.mxu0 %v402
    %413 = vmatprep.subr.bf16.mxu0 0
    %414 = vmatpush1.bf16.msra.mxu0 %v401
    %415 = vmatprep.subr.bf16.mxu0 0
    %416 = vmatpush1.bf16.msra.mxu0 %v400
    %417 = vmatprep.subr.bf16.mxu0 0
    %418 = vmatpush1.bf16.msra.mxu0 %v399
    %419 = vmatprep.subr.bf16.mxu0 0
    %420 = vmatpush1.bf16.msra.mxu0 %v398
    %421 = vmatprep.subr.bf16.mxu0 0
    %422 = vmatpush1.bf16.msra.mxu0 %v397
    %423 = vmatprep.subr.bf16.mxu0 0
    %424 = vmatpush1.bf16.msra.mxu0 %v396
    %425 = vmatprep.subr.bf16.mxu0 0
    %426 = vmatpush1.bf16.msra.mxu0 %v395
    %427 = vmatprep.subr.bf16.mxu0 0
    %428 = vmatpush2.bf16.msra.mxu0 0
    %429 = vmatprep.subr.bf16.mxu0 0
    %430 = vmatpush2.bf16.msra.mxu0 0
    %431 = vmatprep.subr.bf16.mxu0 0
    %432 = vmatpush2.bf16.msra.mxu0 0
    %433 = vmatprep.subr.bf16.mxu0 0
    %434 = vmatpush2.bf16.msra.mxu0 0
    %435 = vmatprep.subr.bf16.mxu0 0
    %436 = vmatpush2.bf16.msra.mxu0 0
    %437 = vmatprep.subr.bf16.mxu0 0
    %438 = vmatpush2.bf16.msra.mxu0 0
    %439 = vmatprep.subr.bf16.mxu0 0
    %440 = vmatpush2.bf16.msra.mxu0 0
    %441 = vmatprep.subr.bf16.mxu0 0
    %442 = vmatpush2.bf16.msra.mxu0 0
    %443 = vmatprep.mubr.bf16.mxu0 0
    %444 = vmatmul.mubr.bf16.gmra.mxu0 %v339
    %v445 = vpop.f32.mrf.mxu0
    %v446 = vadd.f32 %v361, %v445
    %v447 = vpop.f32.mrf.mxu0
    %v448 = vpop.f32.mrf.mxu0
    %v449 = vpop.f32.mrf.mxu0
    %450 = vdwg.mxu0
    %vm451 = vcmask 7168
    %452 = vst.msk [vmem:[%s11] sm:$0xff] %vm451, %v446
    // Predicated region
    $region50: #{tpu_custom_call.1} parent=1 // pred_check
      _
    $region51: #{tpu_custom_call.1} parent=1 // pred_check_branch
      %454 = sbr.rel (0) target = $region53
    $region52: #{tpu_custom_call.1} parent=1 // pred_region
      _
    $region53: #{tpu_custom_call.1} parent=1 // pred_fallthru
      _
    // Predicated region
    $region54: #{tpu_custom_call.1} parent=1 // pred_check
      _
    $region55: #{tpu_custom_call.1} parent=1 // pred_check_branch
      %456 = sbr.rel (0) target = $region57
    $region56: #{tpu_custom_call.1} parent=1 // pred_region
      _
    $region57: #{tpu_custom_call.1} parent=1 // pred_fallthru
      _
    %457 = vsyncpa [#allocation4], 1

</llo_original>
